<compile_context>
chip_gen: v5e
topology: v5e:2x2
jax: 0.10.0
libtpu: 0.0.40
codegen_flags: <defaults>
</compile_context>

<pallas_src>
import jax
import jax.numpy as jnp
from jax.experimental import pallas as pl
from jax.experimental.pallas import tpu as pltpu


# --------------------------------------------------------------------------
# Kernels
# --------------------------------------------------------------------------
def _se_fused_kernel(x_ref, w1t_ref, w2t_ref, o_ref):
    # x_ref  : (TB, C, HW)  native dtype
    # w1t_ref: (C, Cr)      fc1 weight, transposed, pre-scaled by 1/HW, f32
    # w2t_ref: (Cr, C)      fc2 weight, transposed, f32
    x = x_ref[...]                                   # keep native dtype
    tb, c, hw = x.shape

    if c % 8 == 0:
        # Global average pool as a ones-vector matmul on the MXU (f32 acc).
        # The reshape is layout-free because C is a multiple of 8 sublanes.
        ones = jnp.ones((hw, 1), dtype=x.dtype)
        pooled = jnp.dot(x.reshape(tb * c, hw), ones,
                         preferred_element_type=jnp.float32).reshape(tb, c)
    else:
        # Guard: avoid a reshape that would cross the (8,128) tiling.
        pooled = jnp.sum(x.astype(jnp.float32), axis=-1)

    # fc1 (1/HW folded in) -> ReLU -> fc2 -> sigmoid, f32 on tiny tiles.
    y = jnp.maximum(jnp.dot(pooled, w1t_ref[...],
                            preferred_element_type=jnp.float32), 0.0)
    s = jax.nn.sigmoid(jnp.dot(y, w2t_ref[...],
                               preferred_element_type=jnp.float32))

    # Gate in the input dtype (halves VALU/VMEM bytes for bf16 inputs).
    o_ref[...] = (x * s[:, :, None].astype(x.dtype)).astype(o_ref.dtype)


def _make_pool_gate_kernel(hw_total):
    """Two-pass fallback, pass 1: pool x over HW tiles and emit the gate."""
    def kernel(x_ref, w1t_ref, w2t_ref, gate_ref, acc_ref):
        h = pl.program_id(1)

        @pl.when(h == 0)
        def _():
            acc_ref[...] = jnp.zeros_like(acc_ref)

        x = x_ref[...]                                   # (1, C, THW)
        thw = x.shape[-1]
        # Mask lanes beyond the true HW on the ragged trailing tile (input
        # garbage there would otherwise corrupt the reduction).
        col = jax.lax.broadcasted_iota(jnp.int32, x.shape, 2)
        x32 = jnp.where(h * thw + col < hw_total, x.astype(jnp.float32), 0.0)
        acc_ref[...] += jnp.sum(x32, axis=-1)            # (1, C)

        @pl.when(h == pl.num_programs(1) - 1)
        def _():
            pooled = acc_ref[...]                        # (1, C); 1/HW in w1t
            y = jnp.maximum(jnp.dot(pooled, w1t_ref[...],
                                    preferred_element_type=jnp.float32), 0.0)
            s = jax.nn.sigmoid(jnp.dot(y, w2t_ref[...],
                                       preferred_element_type=jnp.float32))
            gate_ref[...] = s[:, :, None]                # (1, C, 1) f32
    return kernel


def _se_apply_kernel(x_ref, gate_ref, o_ref):
    """Two-pass fallback, pass 2: apply the per-(b, c) gate to an HW tile."""
    x = x_ref[...]                                       # (1, C, THW)
    g = gate_ref[...].astype(x.dtype)                    # (1, C, 1)
    o_ref[...] = (x * g).astype(o_ref.dtype)


# --------------------------------------------------------------------------
# Wrapper
# --------------------------------------------------------------------------
def _vmem_capacity_bytes():
    """Per-core VMEM capacity; conservative (v7x) fallback if unavailable."""
    try:
        info = pltpu.get_tpu_info()
        cap = getattr(info, "vmem_capacity_bytes", None)
        if cap:
            return int(cap)
    except Exception:
        pass
    return 64 * 1024 * 1024


def se_block(x, w1, w2, *, target_block_bytes=8 * 1024 * 1024,
             max_block_bytes=None):
    """SEBlock forward. x: (B, C, H, W); w1: (C//r, C); w2: (C, C//r)."""
    B, C, H, W = x.shape
    HW = H * W
    Cr = w1.shape[0]
    x_flat = x.reshape(B, C, HW)

    # fc1 pre-transposed with the 1/HW mean folded in; kept in f32 (tiny) so
    # the fold does not re-quantize low-precision weights.
    w1t = (w1.astype(jnp.float32) / HW).T            # (C, Cr)
    w2t = w2.astype(jnp.float32).T                   # (Cr, C)

    itemsize = jnp.dtype(x.dtype).itemsize
    bytes_per_image = C * HW * itemsize
    weight_bytes = (w1t.size + w2t.size) * 4

    capacity = _vmem_capacity_bytes()
    is_v7x_like = capacity <= (64 << 20)             # 2 TCs, small per-TC VMEM
    usable = (capacity * 7) // 10                    # headroom for internals
    # Double-buffered input + double-buffered output blocks must fit.
    block_budget = max(1, (usable - 2 * weight_bytes - (2 << 20)) // 4)
    if max_block_bytes is not None:
        block_budget = min(block_budget, max_block_bytes)
    block_target = min(target_block_bytes, block_budget)

    if bytes_per_image <= block_budget:
        # -------- fused single pass: 1R + 1W of x, everything in-kernel ----
        tb = max(1, block_target // bytes_per_image)
        tb = min(tb, B)
        if is_v7x_like and B >= 2:
            # keep >= 2 grid steps so megacore can split the batch axis
            tb = min(tb, pl.cdiv(B, 2))
        grid_b = pl.cdiv(B, tb)                      # ragged trailing block OK

        block_bytes = tb * bytes_per_image
        vmem_limit = int(min(capacity - (2 << 20),
                             max(4 * block_bytes + 2 * weight_bytes + (2 << 20),
                                 32 << 20)))

        out_flat = pl.pallas_call(
            _se_fused_kernel,
            out_shape=jax.ShapeDtypeStruct((B, C, HW), x.dtype),
            grid_spec=pltpu.PrefetchScalarGridSpec(
                num_scalar_prefetch=0,
                grid=(grid_b,),
                in_specs=[
                    pl.BlockSpec((tb, C, HW), lambda b: (b, 0, 0)),
                    pl.BlockSpec((C, Cr), lambda b: (0, 0)),
                    pl.BlockSpec((Cr, C), lambda b: (0, 0)),
                ],
                out_specs=pl.BlockSpec((tb, C, HW), lambda b: (b, 0, 0)),
            ),
            compiler_params=pltpu.CompilerParams(
                dimension_semantics=("parallel",),
                vmem_limit_bytes=vmem_limit,
            ),
        )(x_flat, w1t, w2t)
        return out_flat.reshape(B, C, H, W)

    # -------- two-pass fallback: one image exceeds the block budget --------
    # Pass 1 pools x (tiled over HW) and emits the (B, C, 1) gate; pass 2
    # re-reads x and applies the gate. ~1.5x HBM traffic, but robust (v7x).
    thw = max(128, (block_target // (C * itemsize)) // 128 * 128)
    thw = min(thw, pl.cdiv(HW, 128) * 128)
    if thw >= HW:
        thw = HW
    n_hw = pl.cdiv(HW, thw)
    tile_bytes = C * thw * itemsize

    vmem1 = int(min(capacity - (2 << 20),
                    max(4 * tile_bytes + 2 * weight_bytes + (4 << 20),
                        32 << 20)))
    gate = pl.pallas_call(
        _make_pool_gate_kernel(HW),
        out_shape=jax.ShapeDtypeStruct((B, C, 1), jnp.float32),
        grid_spec=pltpu.PrefetchScalarGridSpec(
            num_scalar_prefetch=0,
            grid=(B, n_hw),
            in_specs=[
                pl.BlockSpec((1, C, thw), lambda b, h: (b, 0, h)),
                pl.BlockSpec((C, Cr), lambda b, h: (0, 0)),
                pl.BlockSpec((Cr, C), lambda b, h: (0, 0)),
            ],
            out_specs=pl.BlockSpec((1, C, 1), lambda b, h: (b, 0, 0)),
            scratch_shapes=[pltpu.VMEM((1, C), jnp.float32)],
        ),
        compiler_params=pltpu.CompilerParams(
            dimension_semantics=("parallel", "arbitrary"),
            vmem_limit_bytes=vmem1,
        ),
    )(x_flat, w1t, w2t)

    vmem2 = int(min(capacity - (2 << 20),
                    max(4 * tile_bytes + 2 * B * C * 4 + (2 << 20), 32 << 20)))
    out_flat = pl.pallas_call(
        _se_apply_kernel,
        out_shape=jax.ShapeDtypeStruct((B, C, HW), x.dtype),
        grid_spec=pltpu.PrefetchScalarGridSpec(
            num_scalar_prefetch=0,
            grid=(B, n_hw),
            in_specs=[
                pl.BlockSpec((1, C, thw), lambda b, h: (b, 0, h)),
                pl.BlockSpec((1, C, 1), lambda b, h: (b, 0, 0)),
            ],
            out_specs=pl.BlockSpec((1, C, thw), lambda b, h: (b, 0, h)),
        ),
        compiler_params=pltpu.CompilerParams(
            dimension_semantics=("parallel", "parallel"),
            vmem_limit_bytes=vmem2,
        ),
    )(x_flat, gate)
    return out_flat.reshape(B, C, H, W)


def se_block_ref(x, w1, w2):
    # Pure-JAX reference mirroring the PyTorch forward.
    y = jnp.mean(x, axis=(2, 3))                 # (B, C)
    y = jnp.maximum(y @ w1.T, 0.0)               # (B, C//r)
    y = jax.nn.sigmoid(y @ w2.T)                 # (B, C)
    return x * y[:, :, None, None]


if __name__ == "__main__":
    key = jax.random.PRNGKey(0)

    def run_case(case_id, B, C, H, W, reduction, **kw):
        kx, k1, k2 = jax.random.split(jax.random.fold_in(key, case_id), 3)
        Cr = max(1, C // reduction)
        x = jax.random.normal(kx, (B, C, H, W), dtype=jnp.float32)
        # nn.Linear(channels, channels//r, bias=False) weight is (out, in).
        w1 = jax.random.normal(k1, (Cr, C), dtype=jnp.float32) * 0.1
        w2 = jax.random.normal(k2, (C, Cr), dtype=jnp.float32) * 0.1
        out = jax.block_until_ready(se_block(x, w1, w2, **kw))
        ref = se_block_ref(x, w1, w2)
        assert out.shape == x.shape
        assert jnp.allclose(out, ref, atol=1e-4, rtol=1e-5), (
            case_id, float(jnp.max(jnp.abs(out - ref))))

    # 1) Fused single-pass path; HW = 324 is NOT a multiple of 128 -> exercises
    #    the unpadded, lane-masked store path (no wrapper pad/slice traffic).
    run_case(1, 8, 32, 18, 18, 16)
    # 2) Ragged batch grid via pl.cdiv (B=7 with small forced blocks).
    run_case(2, 7, 32, 16, 16, 16, target_block_bytes=128 * 1024)
    # 3) Two-pass fallback (force a tiny per-block budget), ragged HW tiles.
    run_case(3, 3, 32, 20, 20, 16, max_block_bytes=16 * 1024)

    print("KERNEL_OK")
</pallas_src>

<mosaic_0001>
module attributes {stable_mosaic.version = 11 : i64} {
  func.func @_se_fused_kernel(%arg0: i32, %arg1: memref<4x32x324xf32, #tpu.memory_space<vmem>>, %arg2: memref<32x2xf32, #tpu.memory_space<vmem>>, %arg3: memref<2x32xf32, #tpu.memory_space<vmem>>, %arg4: memref<4x32x324xf32, #tpu.memory_space<vmem>>) attributes {dimension_semantics = [#tpu.dimension_semantics<parallel>], iteration_bounds = array<i64: 2>, scalar_prefetch = 0 : i64, scratch_operands = 0 : i64, tpu.core_type = #tpu.core_type<tc>, window_params = [{transform_indices = @transform_0, window_bounds = array<i64: 4, 32, 324>}, {pipeline_mode = #tpu.pipeline_mode<synchronous>, transform_indices = @transform_1, window_bounds = array<i64: 32, 2>}, {pipeline_mode = #tpu.pipeline_mode<synchronous>, transform_indices = @transform_2, window_bounds = array<i64: 2, 32>}, {transform_indices = @transform_3, window_bounds = array<i64: 4, 32, 324>}]} {
    %c0 = arith.constant 0 : index
    %c0_0 = arith.constant 0 : index
    %c0_1 = arith.constant 0 : index
    %0 = vector.load %arg1[%c0, %c0_0, %c0_1] : memref<4x32x324xf32, #tpu.memory_space<vmem>>, vector<4x32x324xf32>
    %cst = arith.constant 1.000000e+00 : f32
    %1 = vector.broadcast %cst : f32 to vector<324x1xf32>
    %2 = vector.shape_cast %0 : vector<4x32x324xf32> to vector<128x324xf32>
    %cst_2 = arith.constant dense<0.000000e+00> : vector<128x1xf32>
    %3 = tpu.matmul %2, %1, %cst_2 {dimension_numbers = #tpu.dot_dimension_numbers<[1], [0], [0], [1], [0, 0, 1, 1], [], []>} : vector<128x324xf32>, vector<324x1xf32>, vector<128x1xf32> -> vector<128x1xf32>
    %4 = vector.shape_cast %3 : vector<128x1xf32> to vector<4x32xf32>
    %c0_3 = arith.constant 0 : index
    %c0_4 = arith.constant 0 : index
    %5 = vector.load %arg2[%c0_3, %c0_4] : memref<32x2xf32, #tpu.memory_space<vmem>>, vector<32x2xf32>
    %cst_5 = arith.constant dense<0.000000e+00> : vector<4x2xf32>
    %6 = tpu.matmul %4, %5, %cst_5 {dimension_numbers = #tpu.dot_dimension_numbers<[1], [0], [0], [1], [0, 0, 1, 1], [], []>} : vector<4x32xf32>, vector<32x2xf32>, vector<4x2xf32> -> vector<4x2xf32>
    %cst_6 = arith.constant 0.000000e+00 : f32
    %7 = vector.broadcast %cst_6 : f32 to vector<4x2xf32>
    %8 = arith.maximumf %6, %7 : vector<4x2xf32>
    %c0_7 = arith.constant 0 : index
    %c0_8 = arith.constant 0 : index
    %9 = vector.load %arg3[%c0_7, %c0_8] : memref<2x32xf32, #tpu.memory_space<vmem>>, vector<2x32xf32>
    %cst_9 = arith.constant dense<0.000000e+00> : vector<4x32xf32>
    %10 = tpu.matmul %8, %9, %cst_9 {dimension_numbers = #tpu.dot_dimension_numbers<[1], [0], [0], [1], [0, 0, 1, 1], [], []>} : vector<4x2xf32>, vector<2x32xf32>, vector<4x32xf32> -> vector<4x32xf32>
    %11 = arith.negf %10 : vector<4x32xf32>
    %12 = math.exp %11 : vector<4x32xf32>
    %cst_10 = arith.constant 1.000000e+00 : f32
    %13 = vector.broadcast %cst_10 : f32 to vector<4x32xf32>
    %14 = arith.addf %13, %12 : vector<4x32xf32>
    %15 = arith.divf %13, %14 : vector<4x32xf32>
    %16 = vector.shape_cast %15 : vector<4x32xf32> to vector<4x32x1xf32>
    %17 = vector.broadcast %16 : vector<4x32x1xf32> to vector<4x32x324xf32>
    %18 = arith.mulf %0, %17 : vector<4x32x324xf32>
    %c0_11 = arith.constant 0 : index
    %c0_12 = arith.constant 0 : index
    %c0_13 = arith.constant 0 : index
    %19 = vector.load %arg4[%c0_11, %c0_12, %c0_13] : memref<4x32x324xf32, #tpu.memory_space<vmem>>, vector<4x32x324xf32>
    tpu.vector_store %arg4[%c0_11, %c0_12, %c0_13], %18 {strides = array<i32>} : memref<4x32x324xf32, #tpu.memory_space<vmem>>, vector<4x32x324xf32>,
    return
  }
  func.func @transform_0(%arg0: i32) -> (i32, i32, i32) {
    %c0_i32 = arith.constant 0 : i32
    %c0_i32_0 = arith.constant 0 : i32
    %c0_i32_1 = arith.constant 0 : i32
    return %arg0, %c0_i32, %c0_i32_0 : i32, i32, i32
  }
  func.func @transform_1(%arg0: i32) -> (i32, i32) {
    %c0_i32 = arith.constant 0 : i32
    %c0_i32_0 = arith.constant 0 : i32
    %c0_i32_1 = arith.constant 0 : i32
    return %c0_i32, %c0_i32_0 : i32, i32
  }
  func.func @transform_2(%arg0: i32) -> (i32, i32) {
    %c0_i32 = arith.constant 0 : i32
    %c0_i32_0 = arith.constant 0 : i32
    %c0_i32_1 = arith.constant 0 : i32
    return %c0_i32, %c0_i32_0 : i32, i32
  }
  func.func @transform_3(%arg0: i32) -> (i32, i32, i32) {
    %c0_i32 = arith.constant 0 : i32
    %c0_i32_0 = arith.constant 0 : i32
    %c0_i32_1 = arith.constant 0 : i32
    return %arg0, %c0_i32, %c0_i32_0 : i32, i32, i32
  }
}

</mosaic_0001>

<llo_original>
// kernel: tpu_custom_call.1
$region0: #{tpu_custom_call.1}
  #allocation0 [shape = 'u32[]', space=smem, size = 0x4, offset = 0x4, fixed_abs, tag = 'smem constant byte address 0x4 - core index']
  #allocation1 [shape = 'u32[72,128]{1,0:T(1,128)}', space=vmem, size = 0x9000, scoped, tag = 'internal scratch']
  %s0 = inlined_call_operand.hbm [shape: f32[8,32,324], index: 0, kind: input, shape index: {}]
  %s1 = inlined_call_operand.vmem [shape: f32[32,2], index: 1, kind: input, shape index: {}]
  %s2 = inlined_call_operand.vmem [shape: f32[2,32], index: 2, kind: input, shape index: {}]
  %s3 = inlined_call_operand.hbm [shape: f32[8,32,324], index: 3, kind: output, shape index: {}]
  %s4 = sld [smem:[#allocation0]]
  $region49: #{tpu_custom_call.1} parent=0
    _
  %s6 = ssub.s32 1, %s4
  %s7 = scalar_select 0, %s6, %s4
  $region1: #{tpu_custom_call.1} parent=0
    #allocation2 [shape = 'u8[393216]{0}', space=vmem, size = 0x60000, scoped, tag = 'input window, operand 0']
    #allocation3 [shape = 's32[2]{0}', space=sflag, size = 0x8, scoped, tag = 'scoped memory for tpu_custom_call.1']
    #allocation4 [shape = 's32[2]{0}', space=sflag, size = 0x8, scoped, tag = 'scoped memory for tpu_custom_call.1']
    #allocation5 [shape = 'u8[393216]{0}', space=vmem, size = 0x60000, scoped, tag = 'output window, operand 0']
    %8 = vsyncpa [#allocation3], 0
    %s9 = scalar_lea.sflag [#allocation3], 1
    %10 = vsyncpa %s9, 0
    %11 = vsyncpa [#allocation4], 0
    %s12 = scalar_lea.sflag [#allocation4], 1
    %13 = vsyncpa %s12, 0
    loop: start=0, step=1, limit=4
    $region2: #{tpu_custom_call.1} parent=1 // loop_pre_header
      _
    $region3: #{tpu_custom_call.1} parent=1 // loop_header
      %s15 = sphi 0, %s19
      %p16 = scmp.ge.s32.totalorder %s15, 4
      %s25 = sphi 0, %s27
      %s28 = sphi 0, %s25
      %s29 = sphi 0, %s28
      %s45 = sphi 0, %s29
      %s49 = sphi 0, %s49
      %s51 = sphi 0, %s49
      %s52 = sphi 0, %s51
      %s66 = sphi 0, %s52
      %s70 = sphi 0, %s70
      %s72 = sphi 0, %s70
      %s73 = sphi 0, %s72
      %s87 = sphi 0, %s73
      %s93 = sphi 0, %s95
      %s96 = sphi 0, %s93
      %s97 = sphi 0, %s96
      %s113 = sphi 0, %s97
    $region4: #{tpu_custom_call.1} parent=1 // loop_header_branch
      %18 = sbr.rel (%p16) target = $region8
    $region5: #{tpu_custom_call.1} parent=1 // loop_body
      %s20 = ssub.s32 %s15, 1
      %s21 = ssub.s32 %s15, 2
      %s22 = sadd.s32 %s15, 1
      %s23 = ssub.s32 %s15, %s22
      %p24 = scmp.eq.s32.totalorder %s23, 0
      %s26 = sadd.s32 %s25, 1
      %s27 = scalar_select %p24, %s25, %s26
      %p30 = pneg %p24
      %p31 = scmp.eq.s32.totalorder %s15, 1
      %p32 = por %p30, %p31
      %p33 = scmp.ne.s32.totalorder %s25, %s28
      %p34 = scmp.eq.s32.totalorder %s15, 0
      %p35 = por %p33, %p34
      %p36 = scmp.ne.s32.totalorder %s25, %s28
      %p37 = scmp.eq.s32.totalorder %s20, 1
      %p38 = por %p36, %p37
      %p39 = scmp.ne.s32.totalorder %s28, %s29
      %p40 = scmp.eq.s32.totalorder %s20, 0
      %p41 = por %p39, %p40
      %p42 = scmp.ne.s32.totalorder %s28, %s29
      %p43 = scmp.eq.s32.totalorder %s21, 1
      %p44 = por %p42, %p43
      %p46 = scmp.ne.s32.totalorder %s29, %s45
      %p47 = scmp.eq.s32.totalorder %s21, 0
      %p48 = por %p46, %p47
      %s50 = sadd.s32 %s49, 1
      %p53 = scmp.eq.s32.totalorder %s15, 1
      %p54 = scmp.ne.s32.totalorder %s49, %s51
      %p55 = scmp.eq.s32.totalorder %s15, 0
      %p56 = por %p54, %p55
      %p57 = scmp.ne.s32.totalorder %s49, %s51
      %p58 = scmp.eq.s32.totalorder %s20, 1
      %p59 = por %p57, %p58
      %p60 = scmp.ne.s32.totalorder %s51, %s52
      %p61 = scmp.eq.s32.totalorder %s20, 0
      %p62 = por %p60, %p61
      %p63 = scmp.ne.s32.totalorder %s51, %s52
      %p64 = scmp.eq.s32.totalorder %s21, 1
      %p65 = por %p63, %p64
      %p67 = scmp.ne.s32.totalorder %s52, %s66
      %p68 = scmp.eq.s32.totalorder %s21, 0
      %p69 = por %p67, %p68
      %s71 = sadd.s32 %s70, 1
      %p74 = scmp.eq.s32.totalorder %s15, 1
      %p75 = scmp.ne.s32.totalorder %s70, %s72
      %p76 = scmp.eq.s32.totalorder %s15, 0
      %p77 = por %p75, %p76
      %p78 = scmp.ne.s32.totalorder %s70, %s72
      %p79 = scmp.eq.s32.totalorder %s20, 1
      %p80 = por %p78, %p79
      %p81 = scmp.ne.s32.totalorder %s72, %s73
      %p82 = scmp.eq.s32.totalorder %s20, 0
      %p83 = por %p81, %p82
      %p84 = scmp.ne.s32.totalorder %s72, %s73
      %p85 = scmp.eq.s32.totalorder %s21, 1
      %p86 = por %p84, %p85
      %p88 = scmp.ne.s32.totalorder %s73, %s87
      %p89 = scmp.eq.s32.totalorder %s21, 0
      %p90 = por %p88, %p89
      %s91 = ssub.s32 %s15, %s22
      %p92 = scmp.eq.s32.totalorder %s91, 0
      %s94 = sadd.s32 %s93, 1
      %s95 = scalar_select %p92, %s93, %s94
      %p98 = pneg %p92
      %p99 = scmp.eq.s32.totalorder %s15, 1
      %p100 = por %p98, %p99
      %p101 = scmp.ne.s32.totalorder %s93, %s96
      %p102 = scmp.eq.s32.totalorder %s15, 0
      %p103 = por %p101, %p102
      %p104 = scmp.ne.s32.totalorder %s93, %s96
      %p105 = scmp.eq.s32.totalorder %s20, 1
      %p106 = por %p104, %p105
      %p107 = scmp.ne.s32.totalorder %s96, %s97
      %p108 = scmp.eq.s32.totalorder %s20, 0
      %p109 = por %p107, %p108
      %p110 = scmp.ne.s32.totalorder %s96, %s97
      %p111 = scmp.eq.s32.totalorder %s21, 1
      %p112 = por %p110, %p111
      %p114 = scmp.ne.s32.totalorder %s97, %s113
      %p115 = scmp.eq.s32.totalorder %s21, 0
      %p116 = por %p114, %p115
      %p117 = scmp.le.s32.totalorder 1, %s15
      %p118 = scmp.lt.s32.totalorder %s15, 3
      %p119 = pnand %p117, %p118
      %p120 = pneg %p119
      // Predicated region
      $region9: #{tpu_custom_call.1} parent=5 // pred_check
        _
      $region10: #{tpu_custom_call.1} parent=5 // pred_check_branch
        %122 = sbr.rel (%p119) target = $region12
      $region11: #{tpu_custom_call.1} parent=5 // pred_region
        %s123 = ssub.s32 %s15, 1
        // Predicated region
        $region13: #{tpu_custom_call.1} parent=11 // pred_check
          %p124 = pneg %p62
        $region14: #{tpu_custom_call.1} parent=11 // pred_check_branch
          %126 = sbr.rel (%p124) target = $region16
        $region15: #{tpu_custom_call.1} parent=11 // pred_region
          _
        $region16: #{tpu_custom_call.1} parent=11 // pred_fallthru
          _
        // Predicated region
        $region17: #{tpu_custom_call.1} parent=11 // pred_check
          %p127 = pneg %p83
        $region18: #{tpu_custom_call.1} parent=11 // pred_check_branch
          %129 = sbr.rel (%p127) target = $region20
        $region19: #{tpu_custom_call.1} parent=11 // pred_region
          _
        $region20: #{tpu_custom_call.1} parent=11 // pred_fallthru
          _
      $region12: #{tpu_custom_call.1} parent=5 // pred_fallthru
        _
      %p130 = scmp.lt.s32.totalorder %s15, 2
      // Predicated region
      $region21: #{tpu_custom_call.1} parent=5 // pred_check
        %p131 = pneg %p130
      $region22: #{tpu_custom_call.1} parent=5 // pred_check_branch
        %133 = sbr.rel (%p131) target = $region24
      $region23: #{tpu_custom_call.1} parent=5 // pred_region
        // Predicated region
        $region25: #{tpu_custom_call.1} parent=23 // pred_check
          %p134 = pneg %p35
        $region26: #{tpu_custom_call.1} parent=23 // pred_check_branch
          %136 = sbr.rel (%p134) target = $region28
        $region27: #{tpu_custom_call.1} parent=23 // pred_region
          %s137 = sand.u32 %s25, 1
          %s138 = scalar_lea.sflag [#allocation3], %s137
          %s139 = sand.u32 %s25, 1
          %s140 = smul.addr %s139, 384
          %s141 = scalar_lea.vmem [#allocation2], %s140
          %s142 = smul.u32 4, %s15
          %144 = vsyncadd %s138, 0
          %s145 = smul.addr %s142, 12
          %s146 = smul.addr %s145, 8
          %s147 = scalar_lea.hbm %s0, %s146
          %s148 = sshll.u32 %s147, 4
          %s149 = int_to_ptr.hbm [resolvable:$true] %s148
          %s150 = sshll.u32 %s141, 4
          %s151 = int_to_ptr.vmem [resolvable:$true] %s150
          %156 = dma.hbm_to_vmem [thread:$0]  %s149, 6144, %s151, %s138, 384, 384, 24
        $region28: #{tpu_custom_call.1} parent=23 // pred_fallthru
          _
      $region24: #{tpu_custom_call.1} parent=5 // pred_fallthru
        _
      %p157 = scmp.le.s32.totalorder 1, %s15
      %p158 = scmp.lt.s32.totalorder %s15, 3
      %p159 = pnand %p157, %p158
      %p160 = pneg %p159
      // Predicated region
      $region29: #{tpu_custom_call.1} parent=5 // pred_check
        _
      $region30: #{tpu_custom_call.1} parent=5 // pred_check_branch
        %162 = sbr.rel (%p159) target = $region32
      $region31: #{tpu_custom_call.1} parent=5 // pred_region
        %s163 = ssub.s32 %s15, 1
        %s164 = sand.u32 %s28, 1
        %s165 = scalar_lea.sflag [#allocation3], %s164
        %s166 = sand.u32 %s28, 1
        %s167 = smul.addr %s166, 384
        %s168 = scalar_lea.vmem [#allocation2], %s167
        // Predicated region
        $region33: #{tpu_custom_call.1} parent=31 // pred_check
          %p169 = pneg %p41
        $region34: #{tpu_custom_call.1} parent=31 // pred_check_branch
          %171 = sbr.rel (%p169) target = $region36
        $region35: #{tpu_custom_call.1} parent=31 // pred_region
          %173 = dma.done %s165, 6144
        $region36: #{tpu_custom_call.1} parent=31 // pred_fallthru
          _
        %s174 = sand.u32 %s28, 1
        %s175 = scalar_lea.sflag [#allocation3], %s174
        %s176 = sand.u32 %s28, 1
        %s177 = smul.addr %s176, 384
        %s178 = scalar_lea.vmem [#allocation2], %s177
        %p179 = pneg %p41
        %p180 = pneg %p38
        %p181 = pneg %p62
        %p182 = pneg %p59
        %p183 = pneg %p83
        %p184 = pneg %p80
        %p185 = pneg %p109
        %p186 = pneg %p106
        %s187 = sand.u32 %s96, 1
        %s188 = scalar_lea.sflag [#allocation4], %s187
        %s189 = sand.u32 %s96, 1
        %s190 = smul.addr %s189, 384
        %s191 = scalar_lea.vmem [#allocation5], %s190
        %s192 = smul.u32 4, %s20
        %s193 = smul.u32 4, %s20
        %v194 = vld [vmem:[%s168] sm:$0xff]
        %v195 = vld [vmem:[%s168 + $0x8] sm:$0xff]
        %v196 = vld [vmem:[%s168 + $0x10] sm:$0xff]
        %v197 = vld [vmem:[%s168 + $0x18] sm:$0xff]
        %v198 = vld [vmem:[%s168 + $0x20] sm:$0xff]
        %v199 = vld [vmem:[%s168 + $0x28] sm:$0xff]
        %v200 = vld [vmem:[%s168 + $0x30] sm:$0xff]
        %v201 = vld [vmem:[%s168 + $0x38] sm:$0xff]
        %v202 = vld [vmem:[%s168 + $0x40] sm:$0xff]
        %v203 = vld [vmem:[%s168 + $0x48] sm:$0xff]
        %v204 = vld [vmem:[%s168 + $0x50] sm:$0xff]
        %v205 = vld [vmem:[%s168 + $0x58] sm:$0xff]
        %v206 = vld [vmem:[%s168 + $0x60] sm:$0xff]
        %v207 = vld [vmem:[%s168 + $0x68] sm:$0xff]
        %v208 = vld [vmem:[%s168 + $0x70] sm:$0xff]
        %v209 = vld [vmem:[%s168 + $0x78] sm:$0xff]
        %v210 = vld [vmem:[%s168 + $0x80] sm:$0xff]
        %v211 = vld [vmem:[%s168 + $0x88] sm:$0xff]
        %v212 = vld [vmem:[%s168 + $0x90] sm:$0xff]
        %v213 = vld [vmem:[%s168 + $0x98] sm:$0xff]
        %v214 = vld [vmem:[%s168 + $0xa0] sm:$0xff]
        %v215 = vld [vmem:[%s168 + $0xa8] sm:$0xff]
        %v216 = vld [vmem:[%s168 + $0xb0] sm:$0xff]
        %v217 = vld [vmem:[%s168 + $0xb8] sm:$0xff]
        %v218 = vld [vmem:[%s168 + $0xc0] sm:$0xff]
        %v219 = vld [vmem:[%s168 + $0xc8] sm:$0xff]
        %v220 = vld [vmem:[%s168 + $0xd0] sm:$0xff]
        %v221 = vld [vmem:[%s168 + $0xd8] sm:$0xff]
        %v222 = vld [vmem:[%s168 + $0xe0] sm:$0xff]
        %v223 = vld [vmem:[%s168 + $0xe8] sm:$0xff]
        %v224 = vld [vmem:[%s168 + $0xf0] sm:$0xff]
        %v225 = vld [vmem:[%s168 + $0xf8] sm:$0xff]
        %v226 = vld [vmem:[%s168 + $0x100] sm:$0xff]
        %v227 = vld [vmem:[%s168 + $0x108] sm:$0xff]
        %v228 = vld [vmem:[%s168 + $0x110] sm:$0xff]
        %v229 = vld [vmem:[%s168 + $0x118] sm:$0xff]
        %v230 = vld [vmem:[%s168 + $0x120] sm:$0xff]
        %v231 = vld [vmem:[%s168 + $0x128] sm:$0xff]
        %v232 = vld [vmem:[%s168 + $0x130] sm:$0xff]
        %v233 = vld [vmem:[%s168 + $0x138] sm:$0xff]
        %v234 = vld [vmem:[%s168 + $0x140] sm:$0xff]
        %v235 = vld [vmem:[%s168 + $0x148] sm:$0xff]
        %v236 = vld [vmem:[%s168 + $0x150] sm:$0xff]
        %v237 = vld [vmem:[%s168 + $0x158] sm:$0xff]
        %v238 = vld [vmem:[%s168 + $0x160] sm:$0xff]
        %v239 = vld [vmem:[%s168 + $0x168] sm:$0xff]
        %v240 = vld [vmem:[%s168 + $0x170] sm:$0xff]
        %v241 = vld [vmem:[%s168 + $0x178] sm:$0xff]
        %vm242 = vcmask 556032
        %v244 = vsel %vm242, %v196, 0
        %v247 = vsel %vm242, %v199, 0
        %v250 = vsel %vm242, %v202, 0
        %v253 = vsel %vm242, %v205, 0
        %v256 = vsel %vm242, %v208, 0
        %v259 = vsel %vm242, %v211, 0
        %v262 = vsel %vm242, %v214, 0
        %v265 = vsel %vm242, %v217, 0
        %v268 = vsel %vm242, %v220, 0
        %v271 = vsel %vm242, %v223, 0
        %v274 = vsel %vm242, %v226, 0
        %v277 = vsel %vm242, %v229, 0
        %v280 = vsel %vm242, %v232, 0
        %v283 = vsel %vm242, %v235, 0
        %v286 = vsel %vm242, %v238, 0
        %v289 = vsel %vm242, %v241, 0
        %vm291 = vcmask 1043456
        %v293 = vsel %vm291, 1.0, 0
        %295 = vmatpush.msra.mxu0 1.0
        %296 = vmatpush.msra.mxu0 1.0
        %297 = vmatpush.msra.mxu0 1.0
        %298 = vmatpush.msra.mxu0 1.0
        %299 = vmatpush.msra.mxu0 1.0
        %300 = vmatpush.msra.mxu0 1.0
        %301 = vmatpush.msra.mxu0 1.0
        %302 = vmatpush.msra.mxu0 1.0
        %303 = vmatpush.msra.mxu0 1.0
        %304 = vmatpush.msra.mxu0 1.0
        %305 = vmatpush.msra.mxu0 1.0
        %306 = vmatpush.msra.mxu0 1.0
        %307 = vmatpush.msra.mxu0 1.0
        %308 = vmatpush.msra.mxu0 1.0
        %309 = vmatpush.msra.mxu0 1.0
        %310 = vmatpush.msra.mxu0 1.0
        %311 = vmatmul.f32.gmra.mxu0 %v194
        %v312 = vpop.f32.mrf.mxu0
        %v313 = vadd.f32 0.0, %v312
        %314 = vmatmul.f32.gmra.mxu0 %v197
        %v315 = vpop.f32.mrf.mxu0
        %v316 = vadd.f32 0.0, %v315
        %317 = vmatmul.f32.gmra.mxu0 %v200
        %v318 = vpop.f32.mrf.mxu0
        %v319 = vadd.f32 0.0, %v318
        %320 = vmatmul.f32.gmra.mxu0 %v203
        %v321 = vpop.f32.mrf.mxu0
        %v322 = vadd.f32 0.0, %v321
        %323 = vmatmul.f32.gmra.mxu0 %v206
        %v324 = vpop.f32.mrf.mxu0
        %v325 = vadd.f32 0.0, %v324
        %326 = vmatmul.f32.gmra.mxu0 %v209
        %v327 = vpop.f32.mrf.mxu0
        %v328 = vadd.f32 0.0, %v327
        %329 = vmatmul.f32.gmra.mxu0 %v212
        %v330 = vpop.f32.mrf.mxu0
        %v331 = vadd.f32 0.0, %v330
        %332 = vmatmul.f32.gmra.mxu0 %v215
        %v333 = vpop.f32.mrf.mxu0
        %v334 = vadd.f32 0.0, %v333
        %335 = vmatmul.f32.gmra.mxu0 %v218
        %v336 = vpop.f32.mrf.mxu0
        %v337 = vadd.f32 0.0, %v336
        %338 = vmatmul.f32.gmra.mxu0 %v221
        %v339 = vpop.f32.mrf.mxu0
        %v340 = vadd.f32 0.0, %v339
        %341 = vmatmul.f32.gmra.mxu0 %v224
        %v342 = vpop.f32.mrf.mxu0
        %v343 = vadd.f32 0.0, %v342
        %344 = vmatmul.f32.gmra.mxu0 %v227
        %v345 = vpop.f32.mrf.mxu0
        %v346 = vadd.f32 0.0, %v345
        %347 = vmatmul.f32.gmra.mxu0 %v230
        %v348 = vpop.f32.mrf.mxu0
        %v349 = vadd.f32 0.0, %v348
        %350 = vmatmul.f32.gmra.mxu0 %v233
        %v351 = vpop.f32.mrf.mxu0
        %v352 = vadd.f32 0.0, %v351
        %353 = vmatmul.f32.gmra.mxu0 %v236
        %v354 = vpop.f32.mrf.mxu0
        %v355 = vadd.f32 0.0, %v354
        %356 = vmatmul.f32.gmra.mxu0 %v239
        %v357 = vpop.f32.mrf.mxu0
        %v358 = vadd.f32 0.0, %v357
        %359 = vdwg.mxu0
        %360 = vmatpush.msra.mxu0 1.0
        %361 = vmatpush.msra.mxu0 1.0
        %362 = vmatpush.msra.mxu0 1.0
        %363 = vmatpush.msra.mxu0 1.0
        %364 = vmatpush.msra.mxu0 1.0
        %365 = vmatpush.msra.mxu0 1.0
        %366 = vmatpush.msra.mxu0 1.0
        %367 = vmatpush.msra.mxu0 1.0
        %368 = vmatpush.msra.mxu0 1.0
        %369 = vmatpush.msra.mxu0 1.0
        %370 = vmatpush.msra.mxu0 1.0
        %371 = vmatpush.msra.mxu0 1.0
        %372 = vmatpush.msra.mxu0 1.0
        %373 = vmatpush.msra.mxu0 1.0
        %374 = vmatpush.msra.mxu0 1.0
        %375 = vmatpush.msra.mxu0 1.0
        %376 = vmatmul.f32.gmra.mxu0 %v195
        %v377 = vpop.f32.mrf.mxu0
        %v378 = vadd.f32 %v313, %v377
        %379 = vmatmul.f32.gmra.mxu0 %v198
        %v380 = vpop.f32.mrf.mxu0
        %v381 = vadd.f32 %v316, %v380
        %382 = vmatmul.f32.gmra.mxu0 %v201
        %v383 = vpop.f32.mrf.mxu0
        %v384 = vadd.f32 %v319, %v383
        %385 = vmatmul.f32.gmra.mxu0 %v204
        %v386 = vpop.f32.mrf.mxu0
        %v387 = vadd.f32 %v322, %v386
        %388 = vmatmul.f32.gmra.mxu0 %v207
        %v389 = vpop.f32.mrf.mxu0
        %v390 = vadd.f32 %v325, %v389
        %391 = vmatmul.f32.gmra.mxu0 %v210
        %v392 = vpop.f32.mrf.mxu0
        %v393 = vadd.f32 %v328, %v392
        %394 = vmatmul.f32.gmra.mxu0 %v213
        %v395 = vpop.f32.mrf.mxu0
        %v396 = vadd.f32 %v331, %v395
        %397 = vmatmul.f32.gmra.mxu0 %v216
        %v398 = vpop.f32.mrf.mxu0
        %v399 = vadd.f32 %v334, %v398
        %400 = vmatmul.f32.gmra.mxu0 %v219
        %v401 = vpop.f32.mrf.mxu0
        %v402 = vadd.f32 %v337, %v401
        %403 = vmatmul.f32.gmra.mxu0 %v222
        %v404 = vpop.f32.mrf.mxu0
        %v405 = vadd.f32 %v340, %v404
        %406 = vmatmul.f32.gmra.mxu0 %v225
        %v407 = vpop.f32.mrf.mxu0
        %v408 = vadd.f32 %v343, %v407
        %409 = vmatmul.f32.gmra.mxu0 %v228
        %v410 = vpop.f32.mrf.mxu0
        %v411 = vadd.f32 %v346, %v410
        %412 = vmatmul.f32.gmra.mxu0 %v231
        %v413 = vpop.f32.mrf.mxu0
        %v414 = vadd.f32 %v349, %v413
        %415 = vmatmul.f32.gmra.mxu0 %v234
        %v416 = vpop.f32.mrf.mxu0
        %v417 = vadd.f32 %v352, %v416
        %418 = vmatmul.f32.gmra.mxu0 %v237
        %v419 = vpop.f32.mrf.mxu0
        %v420 = vadd.f32 %v355, %v419
        %421 = vmatmul.f32.gmra.mxu0 %v240
        %v422 = vpop.f32.mrf.mxu0
        %v423 = vadd.f32 %v358, %v422
        %424 = vdwg.mxu0
        %425 = vmatpush.msra.mxu0 0.0
        %426 = vmatpush.msra.mxu0 0.0
        %427 = vmatpush.msra.mxu0 0.0
        %428 = vmatpush.msra.mxu0 0.0
        %429 = vmatpush.msra.mxu0 0.0
        %430 = vmatpush.msra.mxu0 0.0
        %431 = vmatpush.msra.mxu0 0.0
        %432 = vmatpush.msra.mxu0 %v293
        %433 = vmatpush.msra.mxu0 1.0
        %434 = vmatpush.msra.mxu0 1.0
        %435 = vmatpush.msra.mxu0 1.0
        %436 = vmatpush.msra.mxu0 1.0
        %437 = vmatpush.msra.mxu0 1.0
        %438 = vmatpush.msra.mxu0 1.0
        %439 = vmatpush.msra.mxu0 1.0
        %440 = vmatpush.msra.mxu0 1.0
        %441 = vmatmul.f32.gmra.mxu0 %v244
        %v442 = vpop.f32.mrf.mxu0
        %v443 = vadd.f32 %v378, %v442
        %444 = vmatmul.f32.gmra.mxu0 %v247
        %v445 = vpop.f32.mrf.mxu0
        %v446 = vadd.f32 %v381, %v445
        %447 = vmatmul.f32.gmra.mxu0 %v250
        %v448 = vpop.f32.mrf.mxu0
        %v449 = vadd.f32 %v384, %v448
        %450 = vmatmul.f32.gmra.mxu0 %v253
        %v451 = vpop.f32.mrf.mxu0
        %v452 = vadd.f32 %v387, %v451
        %453 = vmatmul.f32.gmra.mxu0 %v256
        %v454 = vpop.f32.mrf.mxu0
        %v455 = vadd.f32 %v390, %v454
        %456 = vmatmul.f32.gmra.mxu0 %v259
        %v457 = vpop.f32.mrf.mxu0
        %v458 = vadd.f32 %v393, %v457
        %459 = vmatmul.f32.gmra.mxu0 %v262
        %v460 = vpop.f32.mrf.mxu0
        %v461 = vadd.f32 %v396, %v460
        %462 = vmatmul.f32.gmra.mxu0 %v265
        %v463 = vpop.f32.mrf.mxu0
        %v464 = vadd.f32 %v399, %v463
        %465 = vmatmul.f32.gmra.mxu0 %v268
        %v466 = vpop.f32.mrf.mxu0
        %v467 = vadd.f32 %v402, %v466
        %468 = vmatmul.f32.gmra.mxu0 %v271
        %v469 = vpop.f32.mrf.mxu0
        %v470 = vadd.f32 %v405, %v469
        %471 = vmatmul.f32.gmra.mxu0 %v274
        %v472 = vpop.f32.mrf.mxu0
        %v473 = vadd.f32 %v408, %v472
        %474 = vmatmul.f32.gmra.mxu0 %v277
        %v475 = vpop.f32.mrf.mxu0
        %v476 = vadd.f32 %v411, %v475
        %477 = vmatmul.f32.gmra.mxu0 %v280
        %v478 = vpop.f32.mrf.mxu0
        %v479 = vadd.f32 %v414, %v478
        %480 = vmatmul.f32.gmra.mxu0 %v283
        %v481 = vpop.f32.mrf.mxu0
        %v482 = vadd.f32 %v417, %v481
        %483 = vmatmul.f32.gmra.mxu0 %v286
        %v484 = vpop.f32.mrf.mxu0
        %v485 = vadd.f32 %v420, %v484
        %486 = vmatmul.f32.gmra.mxu0 %v289
        %v487 = vpop.f32.mrf.mxu0
        %v488 = vadd.f32 %v423, %v487
        %489 = vdwg.mxu0
        %v490 = vld [vmem:[%s1] sm:$0xff]
        %v491 = vld [vmem:[%s1 + $0x8] sm:$0xff]
        %v492 = vld [vmem:[%s1 + $0x10] sm:$0xff]
        %v493 = vld [vmem:[%s1 + $0x18] sm:$0xff]
        %510 = vset.pattern.permute.xlu0 0
        %511 = vperm.xlu0 %510, %v443
        %v512 = vpop.permute.xlu0 %511
        %513 = vset.pattern.permute.xlu0 0
        %514 = vperm.xlu0 %513, %v446
        %v515 = vpop.permute.xlu0 %514
        %516 = vset.pattern.permute.xlu0 0
        %517 = vperm.xlu0 %516, %v449
        %v518 = vpop.permute.xlu0 %517
        %519 = vset.pattern.permute.xlu0 0
        %520 = vperm.xlu0 %519, %v452
        %v521 = vpop.permute.xlu0 %520
        %522 = vset.pattern.permute.xlu0 0
        %523 = vperm.xlu0 %522, %v455
        %v524 = vpop.permute.xlu0 %523
        %525 = vset.pattern.permute.xlu0 0
        %526 = vperm.xlu0 %525, %v458
        %v527 = vpop.permute.xlu0 %526
        %528 = vset.pattern.permute.xlu0 0
        %529 = vperm.xlu0 %528, %v461
        %v530 = vpop.permute.xlu0 %529
        %531 = vset.pattern.permute.xlu0 0
        %532 = vperm.xlu0 %531, %v464
        %v533 = vpop.permute.xlu0 %532
        %534 = vset.pattern.permute.xlu0 0
        %535 = vperm.xlu0 %534, %v467
        %v536 = vpop.permute.xlu0 %535
        %537 = vset.pattern.permute.xlu0 0
        %538 = vperm.xlu0 %537, %v470
        %v539 = vpop.permute.xlu0 %538
        %540 = vset.pattern.permute.xlu0 0
        %541 = vperm.xlu0 %540, %v473
        %v542 = vpop.permute.xlu0 %541
        %543 = vset.pattern.permute.xlu0 0
        %544 = vperm.xlu0 %543, %v476
        %v545 = vpop.permute.xlu0 %544
        %546 = vset.pattern.permute.xlu0 0
        %547 = vperm.xlu0 %546, %v479
        %v548 = vpop.permute.xlu0 %547
        %549 = vset.pattern.permute.xlu0 0
        %550 = vperm.xlu0 %549, %v482
        %v551 = vpop.permute.xlu0 %550
        %552 = vset.pattern.permute.xlu0 0
        %553 = vperm.xlu0 %552, %v485
        %v554 = vpop.permute.xlu0 %553
        %555 = vset.pattern.permute.xlu0 0
        %556 = vperm.xlu0 %555, %v488
        %v557 = vpop.permute.xlu0 %556
        %v558 = vlaneseq
        %v559 = vand.u32 %v558, 127
        %v560 = vperm.slane %v512, %v559
        %v561 = vadd.s32 %v559, 4294967288
        %v562 = vperm.slane %v515, %v561
        %vm563 = vcmask 130112
        %v564 = vsel %vm563, %v562, %v560
        %v565 = vadd.s32 %v559, 4294967280
        %v566 = vperm.slane %v518, %v565
        %vm567 = vcmask 195712
        %v568 = vsel %vm567, %v566, %v564
        %v569 = vadd.s32 %v559, 4294967272
        %v570 = vperm.slane %v521, %v569
        %vm571 = vcmask 261312
        %v572 = vsel %vm571, %v570, %v568
        %v573 = vperm.slane %v524, %v559
        %v574 = vperm.slane %v527, %v561
        %v575 = vsel %vm563, %v574, %v573
        %v576 = vperm.slane %v530, %v565
        %v577 = vsel %vm567, %v576, %v575
        %v578 = vperm.slane %v533, %v569
        %v579 = vsel %vm571, %v578, %v577
        %v580 = vperm.slane %v536, %v559
        %v581 = vperm.slane %v539, %v561
        %v582 = vsel %vm563, %v581, %v580
        %v583 = vperm.slane %v542, %v565
        %v584 = vsel %vm567, %v583, %v582
        %v585 = vperm.slane %v545, %v569
        %v586 = vsel %vm571, %v585, %v584
        %v587 = vperm.slane %v548, %v559
        %v588 = vperm.slane %v551, %v561
        %v589 = vsel %vm563, %v588, %v587
        %v590 = vperm.slane %v554, %v565
        %v591 = vsel %vm567, %v590, %v589
        %v592 = vperm.slane %v557, %v569
        %v593 = vsel %vm571, %v592, %v591
        %vm594 = vcmask 1041409
        %v595 = vsel %vm594, %v579, %v572
        %vm596 = vcmask 1042434
        %v597 = vsel %vm596, %v586, %v595
        %vm598 = vcmask 1043459
        %v599 = vsel %vm598, %v593, %v597
        %vm600 = vcmask 261120
        %v601 = vsel %vm600, %v599, 0
        %603 = vmatpush.msra.mxu0 0.0
        %604 = vmatpush.msra.mxu0 0.0
        %605 = vmatpush.msra.mxu0 0.0
        %606 = vmatpush.msra.mxu0 0.0
        %607 = vmatpush.msra.mxu0 0.0
        %608 = vmatpush.msra.mxu0 0.0
        %609 = vmatpush.msra.mxu0 0.0
        %610 = vmatpush.msra.mxu0 0.0
        %611 = vmatpush.msra.mxu0 0.0
        %612 = vmatpush.msra.mxu0 0.0
        %613 = vmatpush.msra.mxu0 0.0
        %614 = vmatpush.msra.mxu0 0.0
        %615 = vmatpush.msra.mxu0 %v493
        %616 = vmatpush.msra.mxu0 %v492
        %617 = vmatpush.msra.mxu0 %v491
        %618 = vmatpush.msra.mxu0 %v490
        %619 = vmatmul.f32.gmra.mxu0 %v601
        %v620 = vpop.f32.mrf.mxu0
        %v621 = vadd.f32 0.0, %v620
        %622 = vdwg.mxu0
        %v623 = vmax.f32 %v621, 0.0
        %v624 = vld [vmem:[%s2] sm:$0x3]
        %vm625 = vcmask 15360
        %v627 = vsel %vm625, %v623, 0
        %vm629 = vcmask 1041408
        %v631 = vsel %vm629, %v624, 0
        %633 = vmatpush.msra.mxu0 0.0
        %634 = vmatpush.msra.mxu0 0.0
        %635 = vmatpush.msra.mxu0 0.0
        %636 = vmatpush.msra.mxu0 0.0
        %637 = vmatpush.msra.mxu0 0.0
        %638 = vmatpush.msra.mxu0 0.0
        %639 = vmatpush.msra.mxu0 0.0
        %640 = vmatpush.msra.mxu0 0.0
        %641 = vmatpush.msra.mxu0 0.0
        %642 = vmatpush.msra.mxu0 0.0
        %643 = vmatpush.msra.mxu0 0.0
        %644 = vmatpush.msra.mxu0 0.0
        %645 = vmatpush.msra.mxu0 0.0
        %646 = vmatpush.msra.mxu0 0.0
        %647 = vmatpush.msra.mxu0 0.0
        %648 = vmatpush.msra.mxu0 %v631
        %649 = vmatmul.f32.gmra.mxu0 %v627
        %v650 = vpop.f32.mrf.mxu0
        %v651 = vadd.f32 0.0, %v650
        %652 = vdwg.mxu0
        %v653 = vxor.u32 %v651, 2147483648
        %v654 = vmul.f32 %v653, 1.442695
        %v655 = vpow.pop %v654
        %v656 = vadd.f32 %v655, 1.0
        %v657 = vrcp.pop %v656
        %v658 = vmul.f32 %v656, %v657
        %v659 = vsub.f32 1.0, %v658
        %v660 = vmul.f32 %v657, %v659
        %v661 = vadd.f32 %v657, %v660
        %vm662 = vweird.f32 %v656
        %vm663 = vweird.f32 %v657
        %vm664 = vmor %vm662, %vm663
        %v665 = vsel %vm664, %v657, %v661
        %v666 = vand.u32 2147483647, %v656
        %vm667 = vcmp.eq.f32.partialorder %v666, 8.507059e+37
        %v668 = vand.u32 %v656, 2147483648
        %v669 = vor.u32 1.1754944e-38, %v668
        %v670 = vsel %vm667, %v669, %v665
        %v671 = vmul.f32 1.0, %v670
        %v672 = vperm.slane %v671, 0
        %v673 = vlaneseq
        %v674 = vshrl.u32 %v673, 7
        %676 = vset.pattern.permute.xlu0 %v674
        %677 = vperm.xlu0 %676, %v672
        %v678 = vpop.permute.xlu0 %677
        %v679 = vlaneseq
        %v680 = vshrl.u32 %v679, 7
        %v681 = vadd.s32 %v680, 8
        %682 = vset.pattern.permute.xlu0 %v681
        %683 = vperm.xlu0 %682, %v672
        %v684 = vpop.permute.xlu0 %683
        %v685 = vlaneseq
        %v686 = vshrl.u32 %v685, 7
        %v687 = vadd.s32 %v686, 16
        %688 = vset.pattern.permute.xlu0 %v687
        %689 = vperm.xlu0 %688, %v672
        %v690 = vpop.permute.xlu0 %689
        %v691 = vlaneseq
        %v692 = vshrl.u32 %v691, 7
        %v693 = vadd.s32 %v692, 24
        %694 = vset.pattern.permute.xlu0 %v693
        %695 = vperm.xlu0 %694, %v672
        %v696 = vpop.permute.xlu0 %695
        %v697 = vperm.slane %v671, 1
        %v698 = vlaneseq
        %v699 = vshrl.u32 %v698, 7
        %701 = vset.pattern.permute.xlu0 %v699
        %702 = vperm.xlu0 %701, %v697
        %v703 = vpop.permute.xlu0 %702
        %v704 = vlaneseq
        %v705 = vshrl.u32 %v704, 7
        %v706 = vadd.s32 %v705, 8
        %707 = vset.pattern.permute.xlu0 %v706
        %708 = vperm.xlu0 %707, %v697
        %v709 = vpop.permute.xlu0 %708
        %v710 = vlaneseq
        %v711 = vshrl.u32 %v710, 7
        %v712 = vadd.s32 %v711, 16
        %713 = vset.pattern.permute.xlu0 %v712
        %714 = vperm.xlu0 %713, %v697
        %v715 = vpop.permute.xlu0 %714
        %v716 = vlaneseq
        %v717 = vshrl.u32 %v716, 7
        %v718 = vadd.s32 %v717, 24
        %719 = vset.pattern.permute.xlu0 %v718
        %720 = vperm.xlu0 %719, %v697
        %v721 = vpop.permute.xlu0 %720
        %v722 = vperm.slane %v671, 2
        %v723 = vlaneseq
        %v724 = vshrl.u32 %v723, 7
        %726 = vset.pattern.permute.xlu0 %v724
        %727 = vperm.xlu0 %726, %v722
        %v728 = vpop.permute.xlu0 %727
        %v729 = vlaneseq
        %v730 = vshrl.u32 %v729, 7
        %v731 = vadd.s32 %v730, 8
        %732 = vset.pattern.permute.xlu0 %v731
        %733 = vperm.xlu0 %732, %v722
        %v734 = vpop.permute.xlu0 %733
        %v735 = vlaneseq
        %v736 = vshrl.u32 %v735, 7
        %v737 = vadd.s32 %v736, 16
        %738 = vset.pattern.permute.xlu0 %v737
        %739 = vperm.xlu0 %738, %v722
        %v740 = vpop.permute.xlu0 %739
        %v741 = vlaneseq
        %v742 = vshrl.u32 %v741, 7
        %v743 = vadd.s32 %v742, 24
        %744 = vset.pattern.permute.xlu0 %v743
        %745 = vperm.xlu0 %744, %v722
        %v746 = vpop.permute.xlu0 %745
        %v747 = vperm.slane %v671, 3
        %v748 = vlaneseq
        %v749 = vshrl.u32 %v748, 7
        %751 = vset.pattern.permute.xlu0 %v749
        %752 = vperm.xlu0 %751, %v747
        %v753 = vpop.permute.xlu0 %752
        %v754 = vlaneseq
        %v755 = vshrl.u32 %v754, 7
        %v756 = vadd.s32 %v755, 8
        %757 = vset.pattern.permute.xlu0 %v756
        %758 = vperm.xlu0 %757, %v747
        %v759 = vpop.permute.xlu0 %758
        %v760 = vlaneseq
        %v761 = vshrl.u32 %v760, 7
        %v762 = vadd.s32 %v761, 16
        %763 = vset.pattern.permute.xlu0 %v762
        %764 = vperm.xlu0 %763, %v747
        %v765 = vpop.permute.xlu0 %764
        %v766 = vlaneseq
        %v767 = vshrl.u32 %v766, 7
        %v768 = vadd.s32 %v767, 24
        %769 = vset.pattern.permute.xlu0 %v768
        %770 = vperm.xlu0 %769, %v747
        %v771 = vpop.permute.xlu0 %770
        %v772 = vmul.f32 %v194, %v678
        %v773 = vmul.f32 %v195, %v678
        %v774 = vmul.f32 %v196, %v678
        %v775 = vmul.f32 %v197, %v684
        %v776 = vmul.f32 %v198, %v684
        %v777 = vmul.f32 %v199, %v684
        %v778 = vmul.f32 %v200, %v690
        %v779 = vmul.f32 %v201, %v690
        %v780 = vmul.f32 %v202, %v690
        %v781 = vmul.f32 %v203, %v696
        %v782 = vmul.f32 %v204, %v696
        %v783 = vmul.f32 %v205, %v696
        %v784 = vmul.f32 %v206, %v703
        %v785 = vmul.f32 %v207, %v703
        %v786 = vmul.f32 %v208, %v703
        %v787 = vmul.f32 %v209, %v709
        %v788 = vmul.f32 %v210, %v709
        %v789 = vmul.f32 %v211, %v709
        %v790 = vmul.f32 %v212, %v715
        %v791 = vmul.f32 %v213, %v715
        %v792 = vmul.f32 %v214, %v715
        %v793 = vmul.f32 %v215, %v721
        %v794 = vmul.f32 %v216, %v721
        %v795 = vmul.f32 %v217, %v721
        %v796 = vmul.f32 %v218, %v728
        %v797 = vmul.f32 %v219, %v728
        %v798 = vmul.f32 %v220, %v728
        %v799 = vmul.f32 %v221, %v734
        %v800 = vmul.f32 %v222, %v734
        %v801 = vmul.f32 %v223, %v734
        %v802 = vmul.f32 %v224, %v740
        %v803 = vmul.f32 %v225, %v740
        %v804 = vmul.f32 %v226, %v740
        %v805 = vmul.f32 %v227, %v746
        %v806 = vmul.f32 %v228, %v746
        %v807 = vmul.f32 %v229, %v746
        %v808 = vmul.f32 %v230, %v753
        %v809 = vmul.f32 %v231, %v753
        %v810 = vmul.f32 %v232, %v753
        %v811 = vmul.f32 %v233, %v759
        %v812 = vmul.f32 %v234, %v759
        %v813 = vmul.f32 %v235, %v759
        %v814 = vmul.f32 %v236, %v765
        %v815 = vmul.f32 %v237, %v765
        %v816 = vmul.f32 %v238, %v765
        %v817 = vmul.f32 %v239, %v771
        %v818 = vmul.f32 %v240, %v771
        %v819 = vmul.f32 %v241, %v771
        %820 = vst [vmem:[%s191] sm:$0xff] %v772
        %821 = vst [vmem:[%s191 + $0x8] sm:$0xff] %v773
        %822 = vst.msk [vmem:[%s191 + $0x10] sm:$0xff] %vm242, %v774
        %823 = vst [vmem:[%s191 + $0x18] sm:$0xff] %v775
        %824 = vst [vmem:[%s191 + $0x20] sm:$0xff] %v776
        %825 = vst.msk [vmem:[%s191 + $0x28] sm:$0xff] %vm242, %v777
        %826 = vst [vmem:[%s191 + $0x30] sm:$0xff] %v778
        %827 = vst [vmem:[%s191 + $0x38] sm:$0xff] %v779
        %828 = vst.msk [vmem:[%s191 + $0x40] sm:$0xff] %vm242, %v780
        %829 = vst [vmem:[%s191 + $0x48] sm:$0xff] %v781
        %830 = vst [vmem:[%s191 + $0x50] sm:$0xff] %v782
        %831 = vst.msk [vmem:[%s191 + $0x58] sm:$0xff] %vm242, %v783
        %832 = vst [vmem:[%s191 + $0x60] sm:$0xff] %v784
        %833 = vst [vmem:[%s191 + $0x68] sm:$0xff] %v785
        %834 = vst.msk [vmem:[%s191 + $0x70] sm:$0xff] %vm242, %v786
        %835 = vst [vmem:[%s191 + $0x78] sm:$0xff] %v787
        %836 = vst [vmem:[%s191 + $0x80] sm:$0xff] %v788
        %837 = vst.msk [vmem:[%s191 + $0x88] sm:$0xff] %vm242, %v789
        %838 = vst [vmem:[%s191 + $0x90] sm:$0xff] %v790
        %839 = vst [vmem:[%s191 + $0x98] sm:$0xff] %v791
        %840 = vst.msk [vmem:[%s191 + $0xa0] sm:$0xff] %vm242, %v792
        %841 = vst [vmem:[%s191 + $0xa8] sm:$0xff] %v793
        %842 = vst [vmem:[%s191 + $0xb0] sm:$0xff] %v794
        %843 = vst.msk [vmem:[%s191 + $0xb8] sm:$0xff] %vm242, %v795
        %844 = vst [vmem:[%s191 + $0xc0] sm:$0xff] %v796
        %845 = vst [vmem:[%s191 + $0xc8] sm:$0xff] %v797
        %846 = vst.msk [vmem:[%s191 + $0xd0] sm:$0xff] %vm242, %v798
        %847 = vst [vmem:[%s191 + $0xd8] sm:$0xff] %v799
        %848 = vst [vmem:[%s191 + $0xe0] sm:$0xff] %v800
        %849 = vst.msk [vmem:[%s191 + $0xe8] sm:$0xff] %vm242, %v801
        %850 = vst [vmem:[%s191 + $0xf0] sm:$0xff] %v802
        %851 = vst [vmem:[%s191 + $0xf8] sm:$0xff] %v803
        %852 = vst.msk [vmem:[%s191 + $0x100] sm:$0xff] %vm242, %v804
        %853 = vst [vmem:[%s191 + $0x108] sm:$0xff] %v805
        %854 = vst [vmem:[%s191 + $0x110] sm:$0xff] %v806
        %855 = vst.msk [vmem:[%s191 + $0x118] sm:$0xff] %vm242, %v807
        %856 = vst [vmem:[%s191 + $0x120] sm:$0xff] %v808
        %857 = vst [vmem:[%s191 + $0x128] sm:$0xff] %v809
        %858 = vst.msk [vmem:[%s191 + $0x130] sm:$0xff] %vm242, %v810
        %859 = vst [vmem:[%s191 + $0x138] sm:$0xff] %v811
        %860 = vst [vmem:[%s191 + $0x140] sm:$0xff] %v812
        %861 = vst.msk [vmem:[%s191 + $0x148] sm:$0xff] %vm242, %v813
        %862 = vst [vmem:[%s191 + $0x150] sm:$0xff] %v814
        %863 = vst [vmem:[%s191 + $0x158] sm:$0xff] %v815
        %864 = vst.msk [vmem:[%s191 + $0x160] sm:$0xff] %vm242, %v816
        %865 = vst [vmem:[%s191 + $0x168] sm:$0xff] %v817
        %866 = vst [vmem:[%s191 + $0x170] sm:$0xff] %v818
        %867 = vst.msk [vmem:[%s191 + $0x178] sm:$0xff] %vm242, %v819
        %s868 = sand.u32 %s96, 1
        %s869 = scalar_lea.sflag [#allocation4], %s868
        %s870 = sand.u32 %s96, 1
        %s871 = smul.addr %s870, 384
        %s872 = scalar_lea.vmem [#allocation5], %s871
        // Predicated region
        $region37: #{tpu_custom_call.1} parent=31 // pred_check
          %p873 = pneg %p106
        $region38: #{tpu_custom_call.1} parent=31 // pred_check_branch
          %875 = sbr.rel (%p873) target = $region40
        $region39: #{tpu_custom_call.1} parent=31 // pred_region
          %s876 = smul.u32 4, %s20
          %878 = vsyncadd %s869, 0
          %s879 = smul.addr %s876, 12
          %s880 = smul.addr %s879, 8
          %s881 = scalar_lea.hbm %s3, %s880
          %s882 = sshll.u32 %s872, 4
          %s883 = int_to_ptr.vmem [resolvable:$true] %s882
          %s884 = sshll.u32 %s881, 4
          %s885 = int_to_ptr.hbm [resolvable:$true] %s884
          %890 = dma.vmem_to_hbm [thread:$0]  %s883, 6144, %s885, %s869, 384, 384, 24
        $region40: #{tpu_custom_call.1} parent=31 // pred_fallthru
          _
      $region32: #{tpu_custom_call.1} parent=5 // pred_fallthru
        _
      %p891 = scmp.le.s32.totalorder 2, %s15
      // Predicated region
      $region41: #{tpu_custom_call.1} parent=5 // pred_check
        %p892 = pneg %p891
      $region42: #{tpu_custom_call.1} parent=5 // pred_check_branch
        %894 = sbr.rel (%p892) target = $region44
      $region43: #{tpu_custom_call.1} parent=5 // pred_region
        %s895 = ssub.s32 %s15, 2
        // Predicated region
        $region45: #{tpu_custom_call.1} parent=43 // pred_check
          %p896 = pneg %p112
        $region46: #{tpu_custom_call.1} parent=43 // pred_check_branch
          %898 = sbr.rel (%p896) target = $region48
        $region47: #{tpu_custom_call.1} parent=43 // pred_region
          %s899 = sand.u32 %s97, 1
          %s900 = scalar_lea.sflag [#allocation4], %s899
          %s901 = sand.u32 %s97, 1
          %s902 = smul.addr %s901, 384
          %s903 = scalar_lea.vmem [#allocation5], %s902
          %905 = dma.done %s900, 6144
        $region48: #{tpu_custom_call.1} parent=43 // pred_fallthru
          _
      $region44: #{tpu_custom_call.1} parent=5 // pred_fallthru
        _
    $region6: #{tpu_custom_call.1} parent=1 // loop_footer
      %s19 = sadd.s32 1, %s15
    $region7: #{tpu_custom_call.1} parent=1 // loop_footer_branch
      %14 = sbr.rel target = $region3
    $region8: #{tpu_custom_call.1} parent=1 // loop_exit
      _
    %906 = vsyncpa [#allocation3], 1
    %s907 = scalar_lea.sflag [#allocation3], 1
    %908 = vsyncpa %s907, 1
    %909 = vsyncpa [#allocation4], 1
    %s910 = scalar_lea.sflag [#allocation4], 1
    %911 = vsyncpa %s910, 1

</llo_original>
